<compile_context>
chip_gen: v5e
topology: v5e:2x2
jax: 0.10.0
libtpu: 0.0.40
codegen_flags: <defaults>
</compile_context>

<pallas_src>
import functools

import jax
import jax.numpy as jnp
import numpy as np
from jax import lax
from jax.experimental import pallas as pl
from jax.experimental.pallas import tpu as pltpu


def _gen_core_delta_kernel(x_ref, wt1_ref, b1_ref, wt2_ref, b2_ref, o_ref,
                           xp_ref, hp_ref, *, H, bt, kin, kout):
    """One batch-tile per grid step.

    x_ref   : (bt, H, kin)         lane-flat NHWC rows, kin = W*c_in
    wt1_ref : (3, kin, kout)       per-ky block-Toeplitz stage-1 weights
                                   (1x1 skip already folded into ky=1)
    b1_ref  : (1, kout)            stage-1 bias tiled per pixel
    wt2_ref : (3, kout, kout)      per-ky block-Toeplitz stage-2 weights
    b2_ref  : (1, kout)
    o_ref   : (bt, H, kout)        lane-dense output rows, kout = W*c_out
    xp_ref  : VMEM (bt, H+2, kin)  height-padded input
    hp_ref  : VMEM (bt, H+2, kout) height-padded ReLU intermediate
    """
    m = bt * H

    # ---- height-pad the input in VMEM (zero only the 2 pad rows) ----------
    xp_ref[:, 0:1, :] = jnp.zeros((bt, 1, kin), jnp.float32)
    xp_ref[:, H + 1:H + 2, :] = jnp.zeros((bt, 1, kin), jnp.float32)
    xp_ref[:, 1:H + 1, :] = x_ref[...]

    # ---- stage 1: (3x3 conv + folded 1x1 skip) + bias, ReLU ----------------
    acc = jnp.dot(xp_ref[:, 0:H, :].reshape(m, kin), wt1_ref[0],
                  preferred_element_type=jnp.float32)
    for dy in (1, 2):
        acc = acc + jnp.dot(xp_ref[:, dy:dy + H, :].reshape(m, kin),
                            wt1_ref[dy], preferred_element_type=jnp.float32)
    h = jnp.maximum(acc + b1_ref[...], 0.0)                      # (m, kout)

    # ---- stage 2: second 3x3 conv -----------------------------------------
    hp_ref[:, 0:1, :] = jnp.zeros((bt, 1, kout), jnp.float32)
    hp_ref[:, H + 1:H + 2, :] = jnp.zeros((bt, 1, kout), jnp.float32)
    hp_ref[:, 1:H + 1, :] = h.reshape(bt, H, kout)

    acc2 = jnp.dot(hp_ref[:, 0:H, :].reshape(m, kout), wt2_ref[0],
                   preferred_element_type=jnp.float32)
    for dy in (1, 2):
        acc2 = acc2 + jnp.dot(hp_ref[:, dy:dy + H, :].reshape(m, kout),
                              wt2_ref[dy], preferred_element_type=jnp.float32)
    o_ref[...] = (acc2 + b2_ref[...]).reshape(bt, H, kout)


def _toeplitz_weights(w_oihw, W):
    """Build per-ky block-Toeplitz matrices for a 3x3 'same' conv.

    w_oihw: (c_out, c_in, 3, 3)  ->  (3, W*c_in, W*c_out)
      Wt[ky][xin*c_in + ci, x*c_out + co] = w[co, ci, ky, xin - x + 1]
      (zero when the kx tap falls outside [0,3), which also implements the
       width-wise zero padding).
    """
    c_out, c_in = w_oihw.shape[0], w_oihw.shape[1]
    wT = jnp.transpose(w_oihw, (2, 3, 1, 0))          # (ky, kx, c_in, c_out)
    xin = jnp.arange(W)[:, None]                      # input column
    xout = jnp.arange(W)[None, :]                     # output column
    kx = xin - xout + 1                               # (W, W)
    valid = ((kx >= 0) & (kx <= 2)).astype(wT.dtype)
    kxc = jnp.clip(kx, 0, 2)
    blocks = wT[:, kxc] * valid[None, :, :, None, None]   # (3, W, W, c_in, c_out)
    return jnp.transpose(blocks, (0, 1, 3, 2, 4)).reshape(3, W * c_in, W * c_out)


def generator_core_delta(x_nchw, w1, b1, ws, w2, b2, *, batch_tile=None):
    """x_nchw: (B, C_in, H, W).  Weights in PyTorch layout:
       w1: (C_out, C_in, 3, 3), b1: (C_out,), ws: (C_out, C_in, 1, 1),
       w2: (C_out, C_out, 3, 3), b2: (C_out,).  Returns NCHW output."""
    B, c_in, H, W = x_nchw.shape
    c_out = w1.shape[0]
    bt = B if batch_tile is None else batch_tile
    assert B % bt == 0, "batch_tile must divide B"
    kin, kout = W * c_in, W * c_out

    # glue: NCHW -> NHWC -> lane-flat rows (B, H, W*c_in); no HBM pad round-trip.
    x = jnp.transpose(x_nchw, (0, 2, 3, 1)).astype(jnp.float32).reshape(B, H, kin)

    # one-time weight repack: fold 1x1 skip into the center tap, then build
    # block-Toeplitz matrices + per-pixel-tiled biases.
    w1f = w1.astype(jnp.float32).at[:, :, 1, 1].add(ws[:, :, 0, 0].astype(jnp.float32))
    wt1 = _toeplitz_weights(w1f, W)                      # (3, kin,  kout)
    wt2 = _toeplitz_weights(w2.astype(jnp.float32), W)   # (3, kout, kout)
    b1r = jnp.tile(b1.astype(jnp.float32), W).reshape(1, kout)
    b2r = jnp.tile(b2.astype(jnp.float32), W).reshape(1, kout)

    kernel = functools.partial(_gen_core_delta_kernel,
                               H=H, bt=bt, kin=kin, kout=kout)

    out = pl.pallas_call(
        kernel,
        out_shape=jax.ShapeDtypeStruct((B, H, kout), jnp.float32),
        grid_spec=pltpu.PrefetchScalarGridSpec(
            num_scalar_prefetch=0,
            grid=(B // bt,),
            in_specs=[
                pl.BlockSpec((bt, H, kin), lambda i: (i, 0, 0)),
                pl.BlockSpec((3, kin, kout), lambda i: (0, 0, 0)),
                pl.BlockSpec((1, kout), lambda i: (0, 0)),
                pl.BlockSpec((3, kout, kout), lambda i: (0, 0, 0)),
                pl.BlockSpec((1, kout), lambda i: (0, 0)),
            ],
            out_specs=pl.BlockSpec((bt, H, kout), lambda i: (i, 0, 0)),
            scratch_shapes=[
                pltpu.VMEM((bt, H + 2, kin), jnp.float32),
                pltpu.VMEM((bt, H + 2, kout), jnp.float32),
            ],
        ),
        compiler_params=pltpu.CompilerParams(
            dimension_semantics=("parallel",)),
    )(x, wt1, b1r, wt2, b2r)

    # lane-dense (B, H, W*c_out) -> (B, H, W, c_out) -> NCHW
    return jnp.transpose(out.reshape(B, H, W, c_out), (0, 3, 1, 2))


def _reference(x, w1, b1, ws, w2, b2):
    """Pure-JAX reference matching the PyTorch module (NCHW)."""
    dn = ('NCHW', 'OIHW', 'NCHW')
    y1 = lax.conv_general_dilated(x, w1, (1, 1), [(1, 1), (1, 1)],
                                  dimension_numbers=dn) + b1.reshape(1, -1, 1, 1)
    ysk = lax.conv_general_dilated(x, ws, (1, 1), [(0, 0), (0, 0)],
                                   dimension_numbers=dn)
    h = jnp.maximum(y1 + ysk, 0.0)
    y2 = lax.conv_general_dilated(h, w2, (1, 1), [(1, 1), (1, 1)],
                                  dimension_numbers=dn) + b2.reshape(1, -1, 1, 1)
    return y2


if __name__ == "__main__":
    B, C_IN, C_OUT, H, W = 2, 4, 8, 16, 16     # W*C_OUT = 128 -> lane-dense

    key = jax.random.PRNGKey(0)
    kx, k1, kb1, ks, k2, kb2 = jax.random.split(key, 6)

    x = jax.random.normal(kx, (B, C_IN, H, W), jnp.float32)
    w1 = jax.random.normal(k1, (C_OUT, C_IN, 3, 3), jnp.float32) * 0.1
    b1 = jax.random.normal(kb1, (C_OUT,), jnp.float32) * 0.1
    ws = jax.random.normal(ks, (C_OUT, C_IN, 1, 1), jnp.float32) * 0.1
    w2 = jax.random.normal(k2, (C_OUT, C_OUT, 3, 3), jnp.float32) * 0.1
    b2 = jax.random.normal(kb2, (C_OUT,), jnp.float32) * 0.1

    out = generator_core_delta(x, w1, b1, ws, w2, b2)
    out = jax.block_until_ready(out)

    ref = jax.block_until_ready(_reference(x, w1, b1, ws, w2, b2))
    np.testing.assert_allclose(np.asarray(out), np.asarray(ref),
                               rtol=1e-4, atol=1e-4)

    print("KERNEL_OK")
</pallas_src>

<mosaic_0001>
module attributes {stable_mosaic.version = 11 : i64} {
  func.func @_gen_core_delta_kernel(%arg0: i32, %arg1: memref<2x16x64xf32, #tpu.memory_space<vmem>>, %arg2: memref<3x64x128xf32, #tpu.memory_space<vmem>>, %arg3: memref<1x128xf32, #tpu.memory_space<vmem>>, %arg4: memref<3x128x128xf32, #tpu.memory_space<vmem>>, %arg5: memref<1x128xf32, #tpu.memory_space<vmem>>, %arg6: memref<2x16x128xf32, #tpu.memory_space<vmem>>, %arg7: memref<2x18x64xf32, #tpu.memory_space<vmem>>, %arg8: memref<2x18x128xf32, #tpu.memory_space<vmem>>) attributes {dimension_semantics = [#tpu.dimension_semantics<parallel>], iteration_bounds = array<i64: 1>, scalar_prefetch = 0 : i64, scratch_operands = 2 : i64, tpu.core_type = #tpu.core_type<tc>, window_params = [{transform_indices = @transform_0, window_bounds = array<i64: 2, 16, 64>}, {pipeline_mode = #tpu.pipeline_mode<synchronous>, transform_indices = @transform_1, window_bounds = array<i64: 3, 64, 128>}, {pipeline_mode = #tpu.pipeline_mode<synchronous>, transform_indices = @transform_2, window_bounds = array<i64: 1, 128>}, {pipeline_mode = #tpu.pipeline_mode<synchronous>, transform_indices = @transform_3, window_bounds = array<i64: 3, 128, 128>}, {pipeline_mode = #tpu.pipeline_mode<synchronous>, transform_indices = @transform_4, window_bounds = array<i64: 1, 128>}, {transform_indices = @transform_5, window_bounds = array<i64: 2, 16, 128>}]} {
    %cst = arith.constant 0.000000e+00 : f32
    %0 = vector.broadcast %cst : f32 to vector<2x1x64xf32>
    %c0 = arith.constant 0 : index
    %c0_0 = arith.constant 0 : index
    %c0_1 = arith.constant 0 : index
    %1 = vector.load %arg7[%c0, %c0_0, %c0_1] : memref<2x18x64xf32, #tpu.memory_space<vmem>>, vector<2x1x64xf32>
    tpu.vector_store %arg7[%c0, %c0_0, %c0_1], %0 {strides = array<i32>} : memref<2x18x64xf32, #tpu.memory_space<vmem>>, vector<2x1x64xf32>,
    %cst_2 = arith.constant 0.000000e+00 : f32
    %2 = vector.broadcast %cst_2 : f32 to vector<2x1x64xf32>
    %c0_3 = arith.constant 0 : index
    %c17 = arith.constant 17 : index
    %c0_4 = arith.constant 0 : index
    %3 = vector.load %arg7[%c0_3, %c17, %c0_4] : memref<2x18x64xf32, #tpu.memory_space<vmem>>, vector<2x1x64xf32>
    tpu.vector_store %arg7[%c0_3, %c17, %c0_4], %2 {strides = array<i32>} : memref<2x18x64xf32, #tpu.memory_space<vmem>>, vector<2x1x64xf32>,
    %c0_5 = arith.constant 0 : index
    %c0_6 = arith.constant 0 : index
    %c0_7 = arith.constant 0 : index
    %4 = vector.load %arg1[%c0_5, %c0_6, %c0_7] : memref<2x16x64xf32, #tpu.memory_space<vmem>>, vector<2x16x64xf32>
    %c0_8 = arith.constant 0 : index
    %c1 = arith.constant 1 : index
    %c0_9 = arith.constant 0 : index
    %5 = vector.load %arg7[%c0_8, %c1, %c0_9] : memref<2x18x64xf32, #tpu.memory_space<vmem>>, vector<2x16x64xf32>
    tpu.vector_store %arg7[%c0_8, %c1, %c0_9], %4 {strides = array<i32>} : memref<2x18x64xf32, #tpu.memory_space<vmem>>, vector<2x16x64xf32>,
    %c0_10 = arith.constant 0 : index
    %c0_11 = arith.constant 0 : index
    %c0_12 = arith.constant 0 : index
    %6 = vector.load %arg7[%c0_10, %c0_11, %c0_12] : memref<2x18x64xf32, #tpu.memory_space<vmem>>, vector<2x16x64xf32>
    %7 = vector.shape_cast %6 : vector<2x16x64xf32> to vector<32x64xf32>
    %c0_13 = arith.constant 0 : index
    %c0_14 = arith.constant 0 : index
    %c0_15 = arith.constant 0 : index
    %8 = vector.load %arg2[%c0_13, %c0_14, %c0_15] : memref<3x64x128xf32, #tpu.memory_space<vmem>>, vector<1x64x128xf32>
    %9 = vector.shape_cast %8 : vector<1x64x128xf32> to vector<64x128xf32>
    %cst_16 = arith.constant dense<0.000000e+00> : vector<32x128xf32>
    %10 = tpu.matmul %7, %9, %cst_16 {dimension_numbers = #tpu.dot_dimension_numbers<[1], [0], [0], [1], [0, 0, 1, 1], [], []>} : vector<32x64xf32>, vector<64x128xf32>, vector<32x128xf32> -> vector<32x128xf32>
    %c0_17 = arith.constant 0 : index
    %c1_18 = arith.constant 1 : index
    %c0_19 = arith.constant 0 : index
    %11 = vector.load %arg7[%c0_17, %c1_18, %c0_19] : memref<2x18x64xf32, #tpu.memory_space<vmem>>, vector<2x16x64xf32>
    %12 = vector.shape_cast %11 : vector<2x16x64xf32> to vector<32x64xf32>
    %c1_20 = arith.constant 1 : index
    %c0_21 = arith.constant 0 : index
    %c0_22 = arith.constant 0 : index
    %13 = vector.load %arg2[%c1_20, %c0_21, %c0_22] : memref<3x64x128xf32, #tpu.memory_space<vmem>>, vector<1x64x128xf32>
    %14 = vector.shape_cast %13 : vector<1x64x128xf32> to vector<64x128xf32>
    %cst_23 = arith.constant dense<0.000000e+00> : vector<32x128xf32>
    %15 = tpu.matmul %12, %14, %cst_23 {dimension_numbers = #tpu.dot_dimension_numbers<[1], [0], [0], [1], [0, 0, 1, 1], [], []>} : vector<32x64xf32>, vector<64x128xf32>, vector<32x128xf32> -> vector<32x128xf32>
    %16 = arith.addf %10, %15 : vector<32x128xf32>
    %c0_24 = arith.constant 0 : index
    %c2 = arith.constant 2 : index
    %c0_25 = arith.constant 0 : index
    %17 = vector.load %arg7[%c0_24, %c2, %c0_25] : memref<2x18x64xf32, #tpu.memory_space<vmem>>, vector<2x16x64xf32>
    %18 = vector.shape_cast %17 : vector<2x16x64xf32> to vector<32x64xf32>
    %c2_26 = arith.constant 2 : index
    %c0_27 = arith.constant 0 : index
    %c0_28 = arith.constant 0 : index
    %19 = vector.load %arg2[%c2_26, %c0_27, %c0_28] : memref<3x64x128xf32, #tpu.memory_space<vmem>>, vector<1x64x128xf32>
    %20 = vector.shape_cast %19 : vector<1x64x128xf32> to vector<64x128xf32>
    %cst_29 = arith.constant dense<0.000000e+00> : vector<32x128xf32>
    %21 = tpu.matmul %18, %20, %cst_29 {dimension_numbers = #tpu.dot_dimension_numbers<[1], [0], [0], [1], [0, 0, 1, 1], [], []>} : vector<32x64xf32>, vector<64x128xf32>, vector<32x128xf32> -> vector<32x128xf32>
    %22 = arith.addf %16, %21 : vector<32x128xf32>
    %c0_30 = arith.constant 0 : index
    %c0_31 = arith.constant 0 : index
    %23 = vector.load %arg3[%c0_30, %c0_31] : memref<1x128xf32, #tpu.memory_space<vmem>>, vector<1x128xf32>
    %24 = vector.broadcast %23 : vector<1x128xf32> to vector<32x128xf32>
    %25 = arith.addf %22, %24 : vector<32x128xf32>
    %cst_32 = arith.constant 0.000000e+00 : f32
    %26 = vector.broadcast %cst_32 : f32 to vector<32x128xf32>
    %27 = arith.maximumf %25, %26 : vector<32x128xf32>
    %cst_33 = arith.constant 0.000000e+00 : f32
    %28 = vector.broadcast %cst_33 : f32 to vector<2x1x128xf32>
    %c0_34 = arith.constant 0 : index
    %c0_35 = arith.constant 0 : index
    %c0_36 = arith.constant 0 : index
    %29 = vector.load %arg8[%c0_34, %c0_35, %c0_36] : memref<2x18x128xf32, #tpu.memory_space<vmem>>, vector<2x1x128xf32>
    tpu.vector_store %arg8[%c0_34, %c0_35, %c0_36], %28 {strides = array<i32>} : memref<2x18x128xf32, #tpu.memory_space<vmem>>, vector<2x1x128xf32>,
    %cst_37 = arith.constant 0.000000e+00 : f32
    %30 = vector.broadcast %cst_37 : f32 to vector<2x1x128xf32>
    %c0_38 = arith.constant 0 : index
    %c17_39 = arith.constant 17 : index
    %c0_40 = arith.constant 0 : index
    %31 = vector.load %arg8[%c0_38, %c17_39, %c0_40] : memref<2x18x128xf32, #tpu.memory_space<vmem>>, vector<2x1x128xf32>
    tpu.vector_store %arg8[%c0_38, %c17_39, %c0_40], %30 {strides = array<i32>} : memref<2x18x128xf32, #tpu.memory_space<vmem>>, vector<2x1x128xf32>,
    %32 = vector.shape_cast %27 : vector<32x128xf32> to vector<2x16x128xf32>
    %c0_41 = arith.constant 0 : index
    %c1_42 = arith.constant 1 : index
    %c0_43 = arith.constant 0 : index
    %33 = vector.load %arg8[%c0_41, %c1_42, %c0_43] : memref<2x18x128xf32, #tpu.memory_space<vmem>>, vector<2x16x128xf32>
    tpu.vector_store %arg8[%c0_41, %c1_42, %c0_43], %32 {strides = array<i32>} : memref<2x18x128xf32, #tpu.memory_space<vmem>>, vector<2x16x128xf32>,
    %c0_44 = arith.constant 0 : index
    %c0_45 = arith.constant 0 : index
    %c0_46 = arith.constant 0 : index
    %34 = vector.load %arg8[%c0_44, %c0_45, %c0_46] : memref<2x18x128xf32, #tpu.memory_space<vmem>>, vector<2x16x128xf32>
    %35 = vector.shape_cast %34 : vector<2x16x128xf32> to vector<32x128xf32>
    %c0_47 = arith.constant 0 : index
    %c0_48 = arith.constant 0 : index
    %c0_49 = arith.constant 0 : index
    %36 = vector.load %arg4[%c0_47, %c0_48, %c0_49] : memref<3x128x128xf32, #tpu.memory_space<vmem>>, vector<1x128x128xf32>
    %37 = vector.shape_cast %36 : vector<1x128x128xf32> to vector<128x128xf32>
    %cst_50 = arith.constant dense<0.000000e+00> : vector<32x128xf32>
    %38 = tpu.matmul %35, %37, %cst_50 {dimension_numbers = #tpu.dot_dimension_numbers<[1], [0], [0], [1], [0, 0, 1, 1], [], []>} : vector<32x128xf32>, vector<128x128xf32>, vector<32x128xf32> -> vector<32x128xf32>
    %c0_51 = arith.constant 0 : index
    %c1_52 = arith.constant 1 : index
    %c0_53 = arith.constant 0 : index
    %39 = vector.load %arg8[%c0_51, %c1_52, %c0_53] : memref<2x18x128xf32, #tpu.memory_space<vmem>>, vector<2x16x128xf32>
    %40 = vector.shape_cast %39 : vector<2x16x128xf32> to vector<32x128xf32>
    %c1_54 = arith.constant 1 : index
    %c0_55 = arith.constant 0 : index
    %c0_56 = arith.constant 0 : index
    %41 = vector.load %arg4[%c1_54, %c0_55, %c0_56] : memref<3x128x128xf32, #tpu.memory_space<vmem>>, vector<1x128x128xf32>
    %42 = vector.shape_cast %41 : vector<1x128x128xf32> to vector<128x128xf32>
    %cst_57 = arith.constant dense<0.000000e+00> : vector<32x128xf32>
    %43 = tpu.matmul %40, %42, %cst_57 {dimension_numbers = #tpu.dot_dimension_numbers<[1], [0], [0], [1], [0, 0, 1, 1], [], []>} : vector<32x128xf32>, vector<128x128xf32>, vector<32x128xf32> -> vector<32x128xf32>
    %44 = arith.addf %38, %43 : vector<32x128xf32>
    %c0_58 = arith.constant 0 : index
    %c2_59 = arith.constant 2 : index
    %c0_60 = arith.constant 0 : index
    %45 = vector.load %arg8[%c0_58, %c2_59, %c0_60] : memref<2x18x128xf32, #tpu.memory_space<vmem>>, vector<2x16x128xf32>
    %46 = vector.shape_cast %45 : vector<2x16x128xf32> to vector<32x128xf32>
    %c2_61 = arith.constant 2 : index
    %c0_62 = arith.constant 0 : index
    %c0_63 = arith.constant 0 : index
    %47 = vector.load %arg4[%c2_61, %c0_62, %c0_63] : memref<3x128x128xf32, #tpu.memory_space<vmem>>, vector<1x128x128xf32>
    %48 = vector.shape_cast %47 : vector<1x128x128xf32> to vector<128x128xf32>
    %cst_64 = arith.constant dense<0.000000e+00> : vector<32x128xf32>
    %49 = tpu.matmul %46, %48, %cst_64 {dimension_numbers = #tpu.dot_dimension_numbers<[1], [0], [0], [1], [0, 0, 1, 1], [], []>} : vector<32x128xf32>, vector<128x128xf32>, vector<32x128xf32> -> vector<32x128xf32>
    %50 = arith.addf %44, %49 : vector<32x128xf32>
    %c0_65 = arith.constant 0 : index
    %c0_66 = arith.constant 0 : index
    %51 = vector.load %arg5[%c0_65, %c0_66] : memref<1x128xf32, #tpu.memory_space<vmem>>, vector<1x128xf32>
    %52 = vector.broadcast %51 : vector<1x128xf32> to vector<32x128xf32>
    %53 = arith.addf %50, %52 : vector<32x128xf32>
    %54 = vector.shape_cast %53 : vector<32x128xf32> to vector<2x16x128xf32>
    %c0_67 = arith.constant 0 : index
    %c0_68 = arith.constant 0 : index
    %c0_69 = arith.constant 0 : index
    %55 = vector.load %arg6[%c0_67, %c0_68, %c0_69] : memref<2x16x128xf32, #tpu.memory_space<vmem>>, vector<2x16x128xf32>
    tpu.vector_store %arg6[%c0_67, %c0_68, %c0_69], %54 {strides = array<i32>} : memref<2x16x128xf32, #tpu.memory_space<vmem>>, vector<2x16x128xf32>,
    return
  }
  func.func @transform_0(%arg0: i32) -> (i32, i32, i32) {
    %c0_i32 = arith.constant 0 : i32
    %c0_i32_0 = arith.constant 0 : i32
    %c0_i32_1 = arith.constant 0 : i32
    return %arg0, %c0_i32, %c0_i32_0 : i32, i32, i32
  }
  func.func @transform_1(%arg0: i32) -> (i32, i32, i32) {
    %c0_i32 = arith.constant 0 : i32
    %c0_i32_0 = arith.constant 0 : i32
    %c0_i32_1 = arith.constant 0 : i32
    %c0_i32_2 = arith.constant 0 : i32
    return %c0_i32, %c0_i32_0, %c0_i32_1 : i32, i32, i32
  }
  func.func @transform_2(%arg0: i32) -> (i32, i32) {
    %c0_i32 = arith.constant 0 : i32
    %c0_i32_0 = arith.constant 0 : i32
    %c0_i32_1 = arith.constant 0 : i32
    return %c0_i32, %c0_i32_0 : i32, i32
  }
  func.func @transform_3(%arg0: i32) -> (i32, i32, i32) {
    %c0_i32 = arith.constant 0 : i32
    %c0_i32_0 = arith.constant 0 : i32
    %c0_i32_1 = arith.constant 0 : i32
    %c0_i32_2 = arith.constant 0 : i32
    return %c0_i32, %c0_i32_0, %c0_i32_1 : i32, i32, i32
  }
  func.func @transform_4(%arg0: i32) -> (i32, i32) {
    %c0_i32 = arith.constant 0 : i32
    %c0_i32_0 = arith.constant 0 : i32
    %c0_i32_1 = arith.constant 0 : i32
    return %c0_i32, %c0_i32_0 : i32, i32
  }
  func.func @transform_5(%arg0: i32) -> (i32, i32, i32) {
    %c0_i32 = arith.constant 0 : i32
    %c0_i32_0 = arith.constant 0 : i32
    %c0_i32_1 = arith.constant 0 : i32
    return %arg0, %c0_i32, %c0_i32_0 : i32, i32, i32
  }
}

</mosaic_0001>

<llo_original>
// kernel: tpu_custom_call.1
$region0: #{tpu_custom_call.1}
  #allocation0 [shape = 'u32[]', space=smem, size = 0x4, offset = 0x4, fixed_abs, tag = 'smem constant byte address 0x4 - core index']
  #allocation1 [shape = 'u32[72,128]{1,0:T(1,128)}', space=vmem, size = 0x9000, scoped, tag = 'internal scratch']
  #allocation2 [shape = 'f32[2,18,64]{2,1,0:T(8,128)}', space=vmem, size = 0x6000, scoped, tag = 'scratch operand']
  #allocation3 [shape = 'f32[2,18,128]{2,1,0:T(8,128)}', space=vmem, size = 0x6000, scoped, tag = 'scratch operand']
  %s0 = inlined_call_operand.hbm [shape: f32[2,16,64], index: 0, kind: input, shape index: {}]
  %s1 = inlined_call_operand.hbm [shape: f32[3,64,128], index: 1, kind: input, shape index: {}]
  %s2 = inlined_call_operand.vmem [shape: f32[1,128], index: 2, kind: input, shape index: {}]
  %s3 = inlined_call_operand.hbm [shape: f32[3,128,128], index: 3, kind: input, shape index: {}]
  %s4 = inlined_call_operand.vmem [shape: f32[1,128], index: 4, kind: input, shape index: {}]
  %s5 = inlined_call_operand.hbm [shape: f32[2,16,128], index: 5, kind: output, shape index: {}]
  %s6 = sld [smem:[#allocation0]]
  $region42: #{tpu_custom_call.1} parent=0
    _
  %s8 = ssub.s32 1, %s6
  %s9 = scalar_select 0, %s8, %s6
  $region1: #{tpu_custom_call.1} parent=0
    #allocation4 [shape = 'u8[16384]{0}', space=vmem, size = 0x4000, scoped, tag = 'input window, operand 0, single buffered']
    #allocation5 [shape = 's32[1]{0}', space=sflag, size = 0x4, scoped, tag = 'scoped memory for tpu_custom_call.1']
    #allocation6 [shape = 's32[1]{0}', space=sflag, size = 0x4, scoped, tag = 'scoped memory for tpu_custom_call.1']
    #allocation7 [shape = 'u8[98304]{0}', space=vmem, size = 0x18000, scoped, tag = 'input window, operand 1, single buffered']
    #allocation8 [shape = 's32[1]{0}', space=sflag, size = 0x4, scoped, tag = 'scoped memory for tpu_custom_call.1']
    #allocation9 [shape = 'u8[196608]{0}', space=vmem, size = 0x30000, scoped, tag = 'input window, operand 3, single buffered']
    #allocation10 [shape = 'u8[16384]{0}', space=vmem, size = 0x4000, scoped, tag = 'output window, operand 0, single buffered']
    %10 = vsyncpa [#allocation5], 0
    %11 = vsyncpa [#allocation8], 0
    %12 = vsyncpa [#allocation6], 0
    // Predicated region
    $region2: #{tpu_custom_call.1} parent=1 // pred_check
      _
    $region3: #{tpu_custom_call.1} parent=1 // pred_check_branch
      %14 = sbr.rel (0) target = $region5
    $region4: #{tpu_custom_call.1} parent=1 // pred_region
      %16 = vsyncadd [#allocation5], 0
      %s17 = sshll.u32 %s0, 4
      %s18 = int_to_ptr.hbm [resolvable:$true] %s17
      %s19 = sshll.u32 [#allocation4], 4
      %s20 = int_to_ptr.vmem [resolvable:$true] %s19
      %25 = dma.hbm_to_vmem [thread:$0]  %s18, 512, %s20, [#allocation5], 128, 128, 8
    $region5: #{tpu_custom_call.1} parent=1 // pred_fallthru
      _
    // Predicated region
    $region6: #{tpu_custom_call.1} parent=1 // pred_check
      _
    $region7: #{tpu_custom_call.1} parent=1 // pred_check_branch
      %27 = sbr.rel (0) target = $region9
    $region8: #{tpu_custom_call.1} parent=1 // pred_region
      %29 = vsyncadd [#allocation8], 0
      %s30 = sshll.u32 %s1, 4
      %s31 = int_to_ptr.hbm [resolvable:$true] %s30
      %s32 = sshll.u32 [#allocation7], 4
      %s33 = int_to_ptr.vmem [resolvable:$true] %s32
      %38 = dma.hbm_to_vmem [thread:$0]  %s31, 3072, %s33, [#allocation8], 128, 128, 8
    $region9: #{tpu_custom_call.1} parent=1 // pred_fallthru
      _
    // Predicated region
    $region10: #{tpu_custom_call.1} parent=1 // pred_check
      _
    $region11: #{tpu_custom_call.1} parent=1 // pred_check_branch
      %40 = sbr.rel (0) target = $region13
    $region12: #{tpu_custom_call.1} parent=1 // pred_region
      _
    $region13: #{tpu_custom_call.1} parent=1 // pred_fallthru
      _
    // Predicated region
    $region14: #{tpu_custom_call.1} parent=1 // pred_check
      _
    $region15: #{tpu_custom_call.1} parent=1 // pred_check_branch
      %42 = sbr.rel (0) target = $region17
    $region16: #{tpu_custom_call.1} parent=1 // pred_region
      %44 = vsyncadd [#allocation8], 0
      %s45 = sshll.u32 %s3, 4
      %s46 = int_to_ptr.hbm [resolvable:$true] %s45
      %s47 = sshll.u32 [#allocation9], 4
      %s48 = int_to_ptr.vmem [resolvable:$true] %s47
      %53 = dma.hbm_to_vmem [thread:$0]  %s46, 6144, %s48, [#allocation8], 128, 128, 8
    $region17: #{tpu_custom_call.1} parent=1 // pred_fallthru
      _
    // Predicated region
    $region18: #{tpu_custom_call.1} parent=1 // pred_check
      _
    $region19: #{tpu_custom_call.1} parent=1 // pred_check_branch
      %55 = sbr.rel (0) target = $region21
    $region20: #{tpu_custom_call.1} parent=1 // pred_region
      _
    $region21: #{tpu_custom_call.1} parent=1 // pred_fallthru
      _
    // Predicated region
    $region22: #{tpu_custom_call.1} parent=1 // pred_check
      _
    $region23: #{tpu_custom_call.1} parent=1 // pred_check_branch
      %57 = sbr.rel (0) target = $region25
    $region24: #{tpu_custom_call.1} parent=1 // pred_region
      %59 = dma.done [#allocation5], 512
    $region25: #{tpu_custom_call.1} parent=1 // pred_fallthru
      _
    // Predicated region
    $region26: #{tpu_custom_call.1} parent=1 // pred_check
      _
    $region27: #{tpu_custom_call.1} parent=1 // pred_check_branch
      %61 = sbr.rel (0) target = $region29
    $region28: #{tpu_custom_call.1} parent=1 // pred_region
      %63 = dma.done [#allocation8], 3072
    $region29: #{tpu_custom_call.1} parent=1 // pred_fallthru
      _
    // Predicated region
    $region30: #{tpu_custom_call.1} parent=1 // pred_check
      _
    $region31: #{tpu_custom_call.1} parent=1 // pred_check_branch
      %65 = sbr.rel (0) target = $region33
    $region32: #{tpu_custom_call.1} parent=1 // pred_region
      %67 = dma.done [#allocation8], 6144
    $region33: #{tpu_custom_call.1} parent=1 // pred_fallthru
      _
    %vm68 = vcmask 516096
    %69 = vst.msk [vmem:[#allocation2] sm:$0x1] %vm68, 0.0
    %70 = vst.msk [vmem:[#allocation2 + $0x18] sm:$0x1] %vm68, 0.0
    %71 = vst.msk [vmem:[#allocation2 + $0x11] sm:$0x1] %vm68, 0.0
    %72 = vst.msk [vmem:[#allocation2 + $0x29] sm:$0x1] %vm68, 0.0
    %v73 = vld [vmem:[#allocation4] sm:$0xff]
    %v74 = vld [vmem:[#allocation4 + $0x8] sm:$0xff]
    %v75 = vld [vmem:[#allocation4 + $0x10] sm:$0xff]
    %v76 = vld [vmem:[#allocation4 + $0x18] sm:$0xff]
    %vm77 = vcmask 523264
    %78 = vst.msk [vmem:[#allocation2 + $0x1] sm:$0xff] %vm77, %v73
    %79 = vst.msk [vmem:[#allocation2 + $0x9] sm:$0xff] %vm77, %v74
    %80 = vst.msk [vmem:[#allocation2 + $0x19] sm:$0xff] %vm77, %v75
    %81 = vst.msk [vmem:[#allocation2 + $0x21] sm:$0xff] %vm77, %v76
    %v82 = vld [vmem:[#allocation2] sm:$0xff]
    %v83 = vld [vmem:[#allocation2 + $0x8] sm:$0xff]
    %v84 = vld [vmem:[#allocation2 + $0x18] sm:$0xff]
    %v85 = vld [vmem:[#allocation2 + $0x20] sm:$0xff]
    %v86 = vld [vmem:[#allocation7] sm:$0xff]
    %v87 = vld [vmem:[#allocation7 + $0x8] sm:$0xff]
    %v88 = vld [vmem:[#allocation7 + $0x10] sm:$0xff]
    %v89 = vld [vmem:[#allocation7 + $0x18] sm:$0xff]
    %v90 = vld [vmem:[#allocation7 + $0x20] sm:$0xff]
    %v91 = vld [vmem:[#allocation7 + $0x28] sm:$0xff]
    %v92 = vld [vmem:[#allocation7 + $0x30] sm:$0xff]
    %v93 = vld [vmem:[#allocation7 + $0x38] sm:$0xff]
    %v94 = vld [vmem:[#allocation2 + $0x1] sm:$0xff]
    %v95 = vld [vmem:[#allocation2 + $0x9] sm:$0xff]
    %v96 = vld [vmem:[#allocation2 + $0x19] sm:$0xff]
    %v97 = vld [vmem:[#allocation2 + $0x21] sm:$0xff]
    %s98 = scalar_lea.vmem [#allocation7], 64
    %v99 = vld [vmem:[%s98] sm:$0xff]
    %v100 = vld [vmem:[%s98 + $0x8] sm:$0xff]
    %v101 = vld [vmem:[%s98 + $0x10] sm:$0xff]
    %v102 = vld [vmem:[%s98 + $0x18] sm:$0xff]
    %v103 = vld [vmem:[%s98 + $0x20] sm:$0xff]
    %v104 = vld [vmem:[%s98 + $0x28] sm:$0xff]
    %v105 = vld [vmem:[%s98 + $0x30] sm:$0xff]
    %v106 = vld [vmem:[%s98 + $0x38] sm:$0xff]
    %v108 = vsel %vm77, %v94, 0
    %v111 = vsel %vm77, %v95, 0
    %v114 = vsel %vm77, %v96, 0
    %v117 = vsel %vm77, %v97, 0
    %119 = vmatpush.msra.mxu0 0.0
    %120 = vmatpush.msra.mxu0 0.0
    %121 = vmatpush.msra.mxu0 0.0
    %122 = vmatpush.msra.mxu0 0.0
    %123 = vmatpush.msra.mxu0 0.0
    %124 = vmatpush.msra.mxu0 0.0
    %125 = vmatpush.msra.mxu0 0.0
    %126 = vmatpush.msra.mxu0 0.0
    %127 = vmatpush.msra.mxu0 %v106
    %128 = vmatpush.msra.mxu0 %v105
    %129 = vmatpush.msra.mxu0 %v104
    %130 = vmatpush.msra.mxu0 %v103
    %131 = vmatpush.msra.mxu0 %v102
    %132 = vmatpush.msra.mxu0 %v101
    %133 = vmatpush.msra.mxu0 %v100
    %134 = vmatpush.msra.mxu0 %v99
    %135 = vmatmul.f32.gmra.mxu0 %v108
    %v136 = vpop.f32.mrf.mxu0
    %v137 = vadd.f32 0.0, %v136
    %138 = vmatmul.f32.gmra.mxu0 %v111
    %v139 = vpop.f32.mrf.mxu0
    %v140 = vadd.f32 0.0, %v139
    %141 = vmatmul.f32.gmra.mxu0 %v114
    %v142 = vpop.f32.mrf.mxu0
    %v143 = vadd.f32 0.0, %v142
    %144 = vmatmul.f32.gmra.mxu0 %v117
    %v145 = vpop.f32.mrf.mxu0
    %v146 = vadd.f32 0.0, %v145
    %147 = vdwg.mxu0
    %v149 = vsel %vm77, %v82, 0
    %v152 = vsel %vm77, %v83, 0
    %v155 = vsel %vm77, %v84, 0
    %v158 = vsel %vm77, %v85, 0
    %160 = vmatpush.msra.mxu0 0.0
    %161 = vmatpush.msra.mxu0 0.0
    %162 = vmatpush.msra.mxu0 0.0
    %163 = vmatpush.msra.mxu0 0.0
    %164 = vmatpush.msra.mxu0 0.0
    %165 = vmatpush.msra.mxu0 0.0
    %166 = vmatpush.msra.mxu0 0.0
    %167 = vmatpush.msra.mxu0 0.0
    %168 = vmatpush.msra.mxu0 %v93
    %169 = vmatpush.msra.mxu0 %v92
    %170 = vmatpush.msra.mxu0 %v91
    %171 = vmatpush.msra.mxu0 %v90
    %172 = vmatpush.msra.mxu0 %v89
    %173 = vmatpush.msra.mxu0 %v88
    %174 = vmatpush.msra.mxu0 %v87
    %175 = vmatpush.msra.mxu0 %v86
    %176 = vmatmul.f32.gmra.mxu0 %v149
    %v177 = vpop.f32.mrf.mxu0
    %v178 = vadd.f32 %v137, %v177
    %179 = vmatmul.f32.gmra.mxu0 %v152
    %v180 = vpop.f32.mrf.mxu0
    %v181 = vadd.f32 %v140, %v180
    %182 = vmatmul.f32.gmra.mxu0 %v155
    %v183 = vpop.f32.mrf.mxu0
    %v184 = vadd.f32 %v143, %v183
    %185 = vmatmul.f32.gmra.mxu0 %v158
    %v186 = vpop.f32.mrf.mxu0
    %v187 = vadd.f32 %v146, %v186
    %188 = vdwg.mxu0
    %v189 = vld [vmem:[#allocation2 + $0x2] sm:$0xff]
    %v190 = vld [vmem:[#allocation2 + $0xa] sm:$0xff]
    %v191 = vld [vmem:[#allocation2 + $0x1a] sm:$0xff]
    %v192 = vld [vmem:[#allocation2 + $0x22] sm:$0xff]
    %s193 = scalar_lea.vmem [#allocation7], 128
    %v194 = vld [vmem:[%s193] sm:$0xff]
    %v195 = vld [vmem:[%s193 + $0x8] sm:$0xff]
    %v196 = vld [vmem:[%s193 + $0x10] sm:$0xff]
    %v197 = vld [vmem:[%s193 + $0x18] sm:$0xff]
    %v198 = vld [vmem:[%s193 + $0x20] sm:$0xff]
    %v199 = vld [vmem:[%s193 + $0x28] sm:$0xff]
    %v200 = vld [vmem:[%s193 + $0x30] sm:$0xff]
    %v201 = vld [vmem:[%s193 + $0x38] sm:$0xff]
    %v203 = vsel %vm77, %v189, 0
    %v206 = vsel %vm77, %v190, 0
    %v209 = vsel %vm77, %v191, 0
    %v212 = vsel %vm77, %v192, 0
    %214 = vmatpush.msra.mxu0 0.0
    %215 = vmatpush.msra.mxu0 0.0
    %216 = vmatpush.msra.mxu0 0.0
    %217 = vmatpush.msra.mxu0 0.0
    %218 = vmatpush.msra.mxu0 0.0
    %219 = vmatpush.msra.mxu0 0.0
    %220 = vmatpush.msra.mxu0 0.0
    %221 = vmatpush.msra.mxu0 0.0
    %222 = vmatpush.msra.mxu0 %v201
    %223 = vmatpush.msra.mxu0 %v200
    %224 = vmatpush.msra.mxu0 %v199
    %225 = vmatpush.msra.mxu0 %v198
    %226 = vmatpush.msra.mxu0 %v197
    %227 = vmatpush.msra.mxu0 %v196
    %228 = vmatpush.msra.mxu0 %v195
    %229 = vmatpush.msra.mxu0 %v194
    %230 = vmatmul.f32.gmra.mxu0 %v203
    %v231 = vpop.f32.mrf.mxu0
    %v232 = vadd.f32 0.0, %v231
    %233 = vmatmul.f32.gmra.mxu0 %v206
    %v234 = vpop.f32.mrf.mxu0
    %v235 = vadd.f32 0.0, %v234
    %236 = vmatmul.f32.gmra.mxu0 %v209
    %v237 = vpop.f32.mrf.mxu0
    %v238 = vadd.f32 0.0, %v237
    %239 = vmatmul.f32.gmra.mxu0 %v212
    %v240 = vpop.f32.mrf.mxu0
    %v241 = vadd.f32 0.0, %v240
    %242 = vdwg.mxu0
    %v243 = vadd.f32 %v178, %v232
    %v244 = vadd.f32 %v181, %v235
    %v245 = vadd.f32 %v184, %v238
    %v246 = vadd.f32 %v187, %v241
    %v247 = vld [vmem:[%s2] sm:$0x1]
    %v249 = vperm.slane %v247, 0
    %v251 = vadd.f32 %v243, %v249
    %v252 = vadd.f32 %v244, %v249
    %v253 = vadd.f32 %v245, %v249
    %v254 = vadd.f32 %v246, %v249
    %v255 = vmax.f32 %v251, 0.0
    %v256 = vmax.f32 %v252, 0.0
    %v257 = vmax.f32 %v253, 0.0
    %v258 = vmax.f32 %v254, 0.0
    %259 = vst [vmem:[#allocation3] sm:$0x1] 0.0
    %260 = vst [vmem:[#allocation3 + $0x18] sm:$0x1] 0.0
    %261 = vst [vmem:[#allocation3 + $0x11] sm:$0x1] 0.0
    %262 = vst [vmem:[#allocation3 + $0x29] sm:$0x1] 0.0
    %263 = vst [vmem:[#allocation3 + $0x1] sm:$0xff] %v255
    %264 = vst [vmem:[#allocation3 + $0x9] sm:$0xff] %v256
    %265 = vst [vmem:[#allocation3 + $0x19] sm:$0xff] %v257
    %266 = vst [vmem:[#allocation3 + $0x21] sm:$0xff] %v258
    %v267 = vld [vmem:[#allocation3] sm:$0xff]
    %v268 = vld [vmem:[#allocation3 + $0x8] sm:$0xff]
    %v269 = vld [vmem:[#allocation3 + $0x18] sm:$0xff]
    %v270 = vld [vmem:[#allocation3 + $0x20] sm:$0xff]
    %v271 = vld [vmem:[#allocation9] sm:$0xff]
    %v272 = vld [vmem:[#allocation9 + $0x8] sm:$0xff]
    %v273 = vld [vmem:[#allocation9 + $0x10] sm:$0xff]
    %v274 = vld [vmem:[#allocation9 + $0x18] sm:$0xff]
    %v275 = vld [vmem:[#allocation9 + $0x20] sm:$0xff]
    %v276 = vld [vmem:[#allocation9 + $0x28] sm:$0xff]
    %v277 = vld [vmem:[#allocation9 + $0x30] sm:$0xff]
    %v278 = vld [vmem:[#allocation9 + $0x38] sm:$0xff]
    %v279 = vld [vmem:[#allocation9 + $0x40] sm:$0xff]
    %v280 = vld [vmem:[#allocation9 + $0x48] sm:$0xff]
    %v281 = vld [vmem:[#allocation9 + $0x50] sm:$0xff]
    %v282 = vld [vmem:[#allocation9 + $0x58] sm:$0xff]
    %v283 = vld [vmem:[#allocation9 + $0x60] sm:$0xff]
    %v284 = vld [vmem:[#allocation9 + $0x68] sm:$0xff]
    %v285 = vld [vmem:[#allocation9 + $0x70] sm:$0xff]
    %v286 = vld [vmem:[#allocation9 + $0x78] sm:$0xff]
    %v287 = vld [vmem:[#allocation3 + $0x1] sm:$0xff]
    %v288 = vld [vmem:[#allocation3 + $0x9] sm:$0xff]
    %v289 = vld [vmem:[#allocation3 + $0x19] sm:$0xff]
    %v290 = vld [vmem:[#allocation3 + $0x21] sm:$0xff]
    %s291 = scalar_lea.vmem [#allocation9], 128
    %v292 = vld [vmem:[%s291] sm:$0xff]
    %v293 = vld [vmem:[%s291 + $0x8] sm:$0xff]
    %v294 = vld [vmem:[%s291 + $0x10] sm:$0xff]
    %v295 = vld [vmem:[%s291 + $0x18] sm:$0xff]
    %v296 = vld [vmem:[%s291 + $0x20] sm:$0xff]
    %v297 = vld [vmem:[%s291 + $0x28] sm:$0xff]
    %v298 = vld [vmem:[%s291 + $0x30] sm:$0xff]
    %v299 = vld [vmem:[%s291 + $0x38] sm:$0xff]
    %v300 = vld [vmem:[%s291 + $0x40] sm:$0xff]
    %v301 = vld [vmem:[%s291 + $0x48] sm:$0xff]
    %v302 = vld [vmem:[%s291 + $0x50] sm:$0xff]
    %v303 = vld [vmem:[%s291 + $0x58] sm:$0xff]
    %v304 = vld [vmem:[%s291 + $0x60] sm:$0xff]
    %v305 = vld [vmem:[%s291 + $0x68] sm:$0xff]
    %v306 = vld [vmem:[%s291 + $0x70] sm:$0xff]
    %v307 = vld [vmem:[%s291 + $0x78] sm:$0xff]
    %308 = vmatpush.msra.mxu0 %v307
    %309 = vmatpush.msra.mxu0 %v306
    %310 = vmatpush.msra.mxu0 %v305
    %311 = vmatpush.msra.mxu0 %v304
    %312 = vmatpush.msra.mxu0 %v303
    %313 = vmatpush.msra.mxu0 %v302
    %314 = vmatpush.msra.mxu0 %v301
    %315 = vmatpush.msra.mxu0 %v300
    %316 = vmatpush.msra.mxu0 %v299
    %317 = vmatpush.msra.mxu0 %v298
    %318 = vmatpush.msra.mxu0 %v297
    %319 = vmatpush.msra.mxu0 %v296
    %320 = vmatpush.msra.mxu0 %v295
    %321 = vmatpush.msra.mxu0 %v294
    %322 = vmatpush.msra.mxu0 %v293
    %323 = vmatpush.msra.mxu0 %v292
    %324 = vmatmul.f32.gmra.mxu0 %v287
    %v325 = vpop.f32.mrf.mxu0
    %v326 = vadd.f32 0.0, %v325
    %327 = vmatmul.f32.gmra.mxu0 %v288
    %v328 = vpop.f32.mrf.mxu0
    %v329 = vadd.f32 0.0, %v328
    %330 = vmatmul.f32.gmra.mxu0 %v289
    %v331 = vpop.f32.mrf.mxu0
    %v332 = vadd.f32 0.0, %v331
    %333 = vmatmul.f32.gmra.mxu0 %v290
    %v334 = vpop.f32.mrf.mxu0
    %v335 = vadd.f32 0.0, %v334
    %336 = vdwg.mxu0
    %337 = vmatpush.msra.mxu0 %v286
    %338 = vmatpush.msra.mxu0 %v285
    %339 = vmatpush.msra.mxu0 %v284
    %340 = vmatpush.msra.mxu0 %v283
    %341 = vmatpush.msra.mxu0 %v282
    %342 = vmatpush.msra.mxu0 %v281
    %343 = vmatpush.msra.mxu0 %v280
    %344 = vmatpush.msra.mxu0 %v279
    %345 = vmatpush.msra.mxu0 %v278
    %346 = vmatpush.msra.mxu0 %v277
    %347 = vmatpush.msra.mxu0 %v276
    %348 = vmatpush.msra.mxu0 %v275
    %349 = vmatpush.msra.mxu0 %v274
    %350 = vmatpush.msra.mxu0 %v273
    %351 = vmatpush.msra.mxu0 %v272
    %352 = vmatpush.msra.mxu0 %v271
    %353 = vmatmul.f32.gmra.mxu0 %v267
    %v354 = vpop.f32.mrf.mxu0
    %v355 = vadd.f32 %v326, %v354
    %356 = vmatmul.f32.gmra.mxu0 %v268
    %v357 = vpop.f32.mrf.mxu0
    %v358 = vadd.f32 %v329, %v357
    %359 = vmatmul.f32.gmra.mxu0 %v269
    %v360 = vpop.f32.mrf.mxu0
    %v361 = vadd.f32 %v332, %v360
    %362 = vmatmul.f32.gmra.mxu0 %v270
    %v363 = vpop.f32.mrf.mxu0
    %v364 = vadd.f32 %v335, %v363
    %365 = vdwg.mxu0
    %v366 = vld [vmem:[#allocation3 + $0x2] sm:$0xff]
    %v367 = vld [vmem:[#allocation3 + $0xa] sm:$0xff]
    %v368 = vld [vmem:[#allocation3 + $0x1a] sm:$0xff]
    %v369 = vld [vmem:[#allocation3 + $0x22] sm:$0xff]
    %s370 = scalar_lea.vmem [#allocation9], 256
    %v371 = vld [vmem:[%s370] sm:$0xff]
    %v372 = vld [vmem:[%s370 + $0x8] sm:$0xff]
    %v373 = vld [vmem:[%s370 + $0x10] sm:$0xff]
    %v374 = vld [vmem:[%s370 + $0x18] sm:$0xff]
    %v375 = vld [vmem:[%s370 + $0x20] sm:$0xff]
    %v376 = vld [vmem:[%s370 + $0x28] sm:$0xff]
    %v377 = vld [vmem:[%s370 + $0x30] sm:$0xff]
    %v378 = vld [vmem:[%s370 + $0x38] sm:$0xff]
    %v379 = vld [vmem:[%s370 + $0x40] sm:$0xff]
    %v380 = vld [vmem:[%s370 + $0x48] sm:$0xff]
    %v381 = vld [vmem:[%s370 + $0x50] sm:$0xff]
    %v382 = vld [vmem:[%s370 + $0x58] sm:$0xff]
    %v383 = vld [vmem:[%s370 + $0x60] sm:$0xff]
    %v384 = vld [vmem:[%s370 + $0x68] sm:$0xff]
    %v385 = vld [vmem:[%s370 + $0x70] sm:$0xff]
    %v386 = vld [vmem:[%s370 + $0x78] sm:$0xff]
    %387 = vmatpush.msra.mxu0 %v386
    %388 = vmatpush.msra.mxu0 %v385
    %389 = vmatpush.msra.mxu0 %v384
    %390 = vmatpush.msra.mxu0 %v383
    %391 = vmatpush.msra.mxu0 %v382
    %392 = vmatpush.msra.mxu0 %v381
    %393 = vmatpush.msra.mxu0 %v380
    %394 = vmatpush.msra.mxu0 %v379
    %395 = vmatpush.msra.mxu0 %v378
    %396 = vmatpush.msra.mxu0 %v377
    %397 = vmatpush.msra.mxu0 %v376
    %398 = vmatpush.msra.mxu0 %v375
    %399 = vmatpush.msra.mxu0 %v374
    %400 = vmatpush.msra.mxu0 %v373
    %401 = vmatpush.msra.mxu0 %v372
    %402 = vmatpush.msra.mxu0 %v371
    %403 = vmatmul.f32.gmra.mxu0 %v366
    %v404 = vpop.f32.mrf.mxu0
    %v405 = vadd.f32 0.0, %v404
    %406 = vmatmul.f32.gmra.mxu0 %v367
    %v407 = vpop.f32.mrf.mxu0
    %v408 = vadd.f32 0.0, %v407
    %409 = vmatmul.f32.gmra.mxu0 %v368
    %v410 = vpop.f32.mrf.mxu0
    %v411 = vadd.f32 0.0, %v410
    %412 = vmatmul.f32.gmra.mxu0 %v369
    %v413 = vpop.f32.mrf.mxu0
    %v414 = vadd.f32 0.0, %v413
    %415 = vdwg.mxu0
    %v416 = vadd.f32 %v355, %v405
    %v417 = vadd.f32 %v358, %v408
    %v418 = vadd.f32 %v361, %v411
    %v419 = vadd.f32 %v364, %v414
    %v420 = vld [vmem:[%s4] sm:$0x1]
    %v422 = vperm.slane %v420, 0
    %v424 = vadd.f32 %v416, %v422
    %v425 = vadd.f32 %v417, %v422
    %v426 = vadd.f32 %v418, %v422
    %v427 = vadd.f32 %v419, %v422
    %428 = vst [vmem:[#allocation10] sm:$0xff] %v424
    %429 = vst [vmem:[#allocation10 + $0x8] sm:$0xff] %v425
    %430 = vst [vmem:[#allocation10 + $0x10] sm:$0xff] %v426
    %431 = vst [vmem:[#allocation10 + $0x18] sm:$0xff] %v427
    // Predicated region
    $region34: #{tpu_custom_call.1} parent=1 // pred_check
      _
    $region35: #{tpu_custom_call.1} parent=1 // pred_check_branch
      %433 = sbr.rel (0) target = $region37
    $region36: #{tpu_custom_call.1} parent=1 // pred_region
      %435 = vsyncadd [#allocation6], 0
      %s436 = sshll.u32 [#allocation10], 4
      %s437 = int_to_ptr.vmem [resolvable:$true] %s436
      %s438 = sshll.u32 %s5, 4
      %s439 = int_to_ptr.hbm [resolvable:$true] %s438
      %444 = dma.vmem_to_hbm [thread:$0]  %s437, 512, %s439, [#allocation6], 128, 128, 8
    $region37: #{tpu_custom_call.1} parent=1 // pred_fallthru
      _
    // Predicated region
    $region38: #{tpu_custom_call.1} parent=1 // pred_check
      _
    $region39: #{tpu_custom_call.1} parent=1 // pred_check_branch
      %446 = sbr.rel (0) target = $region41
    $region40: #{tpu_custom_call.1} parent=1 // pred_region
      %448 = dma.done [#allocation6], 512
    $region41: #{tpu_custom_call.1} parent=1 // pred_fallthru
      _
    %449 = vsyncpa [#allocation5], 1
    %450 = vsyncpa [#allocation8], 1
    %451 = vsyncpa [#allocation6], 1

</llo_original>
